<compile_context>
chip_gen: v6e
topology: v6e:2x2x1
jax: 0.10.0
libtpu: 0.0.40
codegen_flags: <defaults>
</compile_context>

<pallas_src>
import jax
import jax.numpy as jnp
from jax.experimental import pallas as pl
from jax.experimental.pallas import tpu as pltpu

DIM_DATA = 1
DIM_HIDDEN_GEN = 100
DIM_LATENT = 8          # stands in for args.nz
H_PAD = 128             # hidden padded to a full lane width (lane dim here)
CHUNK = 512             # rows per inner step: (CHUNK, H_PAD) f32 ~= 64 vregs
DEFAULT_TB = 4096       # batch rows per grid step (multiple of CHUNK)


def _round_up(x, m):
    return (x + m - 1) // m * m


def _generator_kernel(x_ref, w1_ref, b1_ref, w2_ref, b2_ref, out_ref):
    # Resident operands: loaded once per grid step (tiny), hoisted above the loop.
    w1 = w1_ref[...]            # (DIM_LATENT, H_PAD)  bf16
    b1 = b1_ref[...]            # (1, H_PAD)           f32
    w2 = w2_ref[...]            # (H_PAD, 1)           bf16
    b2 = b2_ref[...]            # (1, 1)               f32

    n_chunks = x_ref.shape[0] // CHUNK          # static

    def body(c, carry):
        r = pl.multiple_of(c * CHUNK, CHUNK)
        # Layer 1 on the MXU: (CHUNK, K) bf16 @ (K, H) bf16 -> f32 accumulate.
        xb = x_ref[pl.ds(r, CHUNK), :].astype(jnp.bfloat16)
        h = jnp.dot(xb, w1, preferred_element_type=jnp.float32) + b1
        h = jnp.maximum(h, 0.0).astype(jnp.bfloat16)        # ReLU, bf16 for MXU
        # Layer 2 on the MXU (N=1): replaces the VPU multiply + reduction.
        o = jnp.dot(h, w2, preferred_element_type=jnp.float32)   # (CHUNK, 1)
        out_ref[pl.ds(r, CHUNK), :] = (o + b2).astype(out_ref.dtype)
        return carry

    jax.lax.fori_loop(0, n_chunks, body, 0, unroll=True)


def generator_forward(x, w1, b1, w2, b2, *, tb=DEFAULT_TB):
    """x: (..., DIM_LATENT) -> (batch, DIM_DATA), mirroring x.view(-1, DIM_LATENT).

    w1: (DIM_LATENT, DIM_HIDDEN_GEN), b1: (1, DIM_HIDDEN_GEN) or (DIM_HIDDEN_GEN,),
    w2: (DIM_HIDDEN_GEN, DIM_DATA),   b2: (1, DIM_DATA) or (DIM_DATA,).
    """
    x2d = x.reshape(-1, DIM_LATENT)
    B = x2d.shape[0]

    # Pick a batch tile: large (amortizes per-step overhead) but no bigger than
    # the (chunk-rounded) batch, and always a multiple of CHUNK.
    tb = max(CHUNK, min(int(tb), _round_up(B, CHUNK)))
    tb = _round_up(tb, CHUNK)

    n_tiles = pl.cdiv(B, tb)
    Bp = n_tiles * tb
    if Bp != B:
        # Zero-pad ragged batches; padded rows are sliced off below.
        x2d = jnp.pad(x2d, ((0, Bp - B), (0, 0)))

    # Weight prep (tiny one-time casts; zero-padding the hidden dim is benign:
    # relu(0 + 0) = 0 and the padded w2 rows are zero).
    hpad = H_PAD - DIM_HIDDEN_GEN
    w1c = jnp.pad(w1, ((0, 0), (0, hpad))).astype(jnp.bfloat16)             # (K, H_PAD)
    b1c = jnp.pad(b1.reshape(1, -1), ((0, 0), (0, hpad))).astype(jnp.float32)  # (1, H_PAD)
    w2c = jnp.pad(w2, ((0, hpad), (0, 0))).astype(jnp.bfloat16)             # (H_PAD, 1)
    b2c = b2.reshape(1, 1).astype(jnp.float32)                              # (1, 1)

    resident = lambda shape: pl.BlockSpec(shape, lambda i: (0, 0))

    cost = pl.CostEstimate(
        flops=2 * Bp * (DIM_LATENT * H_PAD + H_PAD * DIM_DATA),
        transcendentals=0,
        bytes_accessed=Bp * (DIM_LATENT + DIM_DATA) * 4
        + DIM_LATENT * H_PAD * 2 + H_PAD * 4 + H_PAD * 2 + 4,
    )

    out = pl.pallas_call(
        _generator_kernel,
        out_shape=jax.ShapeDtypeStruct((Bp, DIM_DATA), jnp.float32),
        grid=(n_tiles,),
        in_specs=[
            pl.BlockSpec((tb, DIM_LATENT), lambda i: (i, 0)),   # x streamed, natural layout
            resident((DIM_LATENT, H_PAD)),                      # W1 (resident, bf16)
            resident((1, H_PAD)),                               # b1 (resident, f32)
            resident((H_PAD, DIM_DATA)),                        # w2 (resident, bf16)
            resident((1, DIM_DATA)),                            # b2 (resident, f32)
        ],
        out_specs=pl.BlockSpec((tb, DIM_DATA), lambda i: (i, 0)),
        compiler_params=pltpu.CompilerParams(
            dimension_semantics=("parallel",),
        ),
        cost_estimate=cost,
    )(x2d, w1c, b1c, w2c, b2c)

    return out[:B]


def init_params(key):
    """Deterministic init matching PyTorch nn.Linear default (uniform +-1/sqrt(fan_in))."""
    k1, k2, k3, k4 = jax.random.split(key, 4)
    bound1 = 1.0 / (DIM_LATENT ** 0.5)
    bound2 = 1.0 / (DIM_HIDDEN_GEN ** 0.5)
    w1 = jax.random.uniform(k1, (DIM_LATENT, DIM_HIDDEN_GEN), jnp.float32,
                            minval=-bound1, maxval=bound1)
    b1 = jax.random.uniform(k2, (1, DIM_HIDDEN_GEN), jnp.float32,
                            minval=-bound1, maxval=bound1)
    w2 = jax.random.uniform(k3, (DIM_HIDDEN_GEN, DIM_DATA), jnp.float32,
                            minval=-bound2, maxval=bound2)
    b2 = jax.random.uniform(k4, (1, DIM_DATA), jnp.float32,
                            minval=-bound2, maxval=bound2)
    return w1, b1, w2, b2


if __name__ == "__main__":
    key = jax.random.PRNGKey(0)
    k_params, k_x = jax.random.split(key)
    w1, b1, w2, b2 = init_params(k_params)

    # latent noise batch (the `.view(-1, DIM_LATENT)` handles any leading shape)
    batch = 16
    x = jax.random.normal(k_x, (batch, DIM_LATENT), jnp.float32)

    out = generator_forward(x, w1, b1, w2, b2)
    jax.block_until_ready(out)

    # Reference mirroring the kernel's stated bf16 precision contract
    # (x, w1, w2 and post-ReLU h rounded to bf16; f32 accumulation elsewhere).
    xb = x.astype(jnp.bfloat16).astype(jnp.float32)
    w1b = w1.astype(jnp.bfloat16).astype(jnp.float32)
    w2b = w2.astype(jnp.bfloat16).astype(jnp.float32)
    h = jnp.maximum(xb @ w1b + b1, 0.0)
    hb = h.astype(jnp.bfloat16).astype(jnp.float32)
    ref = hb @ w2b + b2

    assert out.shape == (batch, DIM_DATA)
    assert jnp.allclose(out, ref, atol=2e-3, rtol=2e-3)

    print("KERNEL_OK")
</pallas_src>

<mosaic_0001>
module attributes {stable_mosaic.version = 11 : i64} {
  func.func @_generator_kernel(%arg0: i32, %arg1: memref<512x8xf32, #tpu.memory_space<vmem>>, %arg2: memref<8x128xbf16, #tpu.memory_space<vmem>>, %arg3: memref<1x128xf32, #tpu.memory_space<vmem>>, %arg4: memref<128x1xbf16, #tpu.memory_space<vmem>>, %arg5: memref<1x1xf32, #tpu.memory_space<vmem>>, %arg6: memref<512x1xf32, #tpu.memory_space<vmem>>) attributes {dimension_semantics = [#tpu.dimension_semantics<parallel>], iteration_bounds = array<i64: 1>, scalar_prefetch = 0 : i64, scratch_operands = 0 : i64, tpu.core_type = #tpu.core_type<tc>, window_params = [{transform_indices = @transform_0, window_bounds = array<i64: 512, 8>}, {pipeline_mode = #tpu.pipeline_mode<synchronous>, transform_indices = @transform_1, window_bounds = array<i64: 8, 128>}, {pipeline_mode = #tpu.pipeline_mode<synchronous>, transform_indices = @transform_2, window_bounds = array<i64: 1, 128>}, {pipeline_mode = #tpu.pipeline_mode<synchronous>, transform_indices = @transform_3, window_bounds = array<i64: 128, 1>}, {pipeline_mode = #tpu.pipeline_mode<synchronous>, transform_indices = @transform_4, window_bounds = array<i64: 1, 1>}, {transform_indices = @transform_5, window_bounds = array<i64: 512, 1>}]} {
    %c0 = arith.constant 0 : index
    %c0_0 = arith.constant 0 : index
    %0 = vector.load %arg2[%c0, %c0_0] : memref<8x128xbf16, #tpu.memory_space<vmem>>, vector<8x128xbf16>
    %c0_1 = arith.constant 0 : index
    %c0_2 = arith.constant 0 : index
    %1 = vector.load %arg3[%c0_1, %c0_2] : memref<1x128xf32, #tpu.memory_space<vmem>>, vector<1x128xf32>
    %c0_3 = arith.constant 0 : index
    %c0_4 = arith.constant 0 : index
    %2 = vector.load %arg4[%c0_3, %c0_4] : memref<128x1xbf16, #tpu.memory_space<vmem>>, vector<128x1xbf16>
    %c0_5 = arith.constant 0 : index
    %c0_6 = arith.constant 0 : index
    %3 = vector.load %arg5[%c0_5, %c0_6] : memref<1x1xf32, #tpu.memory_space<vmem>>, vector<1x1xf32>
    %c0_i32 = arith.constant 0 : i32
    %c512_i32 = arith.constant 512 : i32
    %4 = arith.muli %c0_i32, %c512_i32 : i32
    %5 = tpu.assume_multiple %4, 512 : i32
    %6 = arith.index_cast %5 : i32 to index
    %c0_7 = arith.constant 0 : index
    %7 = vector.load %arg1[%6, %c0_7] : memref<512x8xf32, #tpu.memory_space<vmem>>, vector<512x8xf32>
    %8 = arith.truncf %7 : vector<512x8xf32> to vector<512x8xbf16>
    %cst = arith.constant dense<0.000000e+00> : vector<512x128xf32>
    %9 = tpu.matmul %8, %0, %cst {dimension_numbers = #tpu.dot_dimension_numbers<[1], [0], [0], [1], [0, 0, 1, 1], [], []>} : vector<512x8xbf16>, vector<8x128xbf16>, vector<512x128xf32> -> vector<512x128xf32>
    %10 = vector.broadcast %1 : vector<1x128xf32> to vector<512x128xf32>
    %11 = arith.addf %9, %10 : vector<512x128xf32>
    %cst_8 = arith.constant 0.000000e+00 : f32
    %12 = vector.broadcast %cst_8 : f32 to vector<512x128xf32>
    %13 = arith.maximumf %11, %12 : vector<512x128xf32>
    %14 = arith.truncf %13 : vector<512x128xf32> to vector<512x128xbf16>
    %cst_9 = arith.constant dense<0.000000e+00> : vector<512x1xf32>
    %15 = tpu.matmul %14, %2, %cst_9 {dimension_numbers = #tpu.dot_dimension_numbers<[1], [0], [0], [1], [0, 0, 1, 1], [], []>} : vector<512x128xbf16>, vector<128x1xbf16>, vector<512x1xf32> -> vector<512x1xf32>
    %16 = vector.broadcast %3 : vector<1x1xf32> to vector<512x1xf32>
    %17 = arith.addf %15, %16 : vector<512x1xf32>
    %18 = arith.index_cast %5 : i32 to index
    %c0_10 = arith.constant 0 : index
    %19 = vector.load %arg6[%18, %c0_10] : memref<512x1xf32, #tpu.memory_space<vmem>>, vector<512x1xf32>
    tpu.vector_store %arg6[%18, %c0_10], %17 {strides = array<i32>} : memref<512x1xf32, #tpu.memory_space<vmem>>, vector<512x1xf32>,
    %c1_i32 = arith.constant 1 : i32
    return
  }
  func.func @transform_0(%arg0: i32) -> (i32, i32) {
    %c0_i32 = arith.constant 0 : i32
    %c0_i32_0 = arith.constant 0 : i32
    return %arg0, %c0_i32 : i32, i32
  }
  func.func @transform_1(%arg0: i32) -> (i32, i32) {
    %c0_i32 = arith.constant 0 : i32
    %c0_i32_0 = arith.constant 0 : i32
    %c0_i32_1 = arith.constant 0 : i32
    return %c0_i32, %c0_i32_0 : i32, i32
  }
  func.func @transform_2(%arg0: i32) -> (i32, i32) {
    %c0_i32 = arith.constant 0 : i32
    %c0_i32_0 = arith.constant 0 : i32
    %c0_i32_1 = arith.constant 0 : i32
    return %c0_i32, %c0_i32_0 : i32, i32
  }
  func.func @transform_3(%arg0: i32) -> (i32, i32) {
    %c0_i32 = arith.constant 0 : i32
    %c0_i32_0 = arith.constant 0 : i32
    %c0_i32_1 = arith.constant 0 : i32
    return %c0_i32, %c0_i32_0 : i32, i32
  }
  func.func @transform_4(%arg0: i32) -> (i32, i32) {
    %c0_i32 = arith.constant 0 : i32
    %c0_i32_0 = arith.constant 0 : i32
    %c0_i32_1 = arith.constant 0 : i32
    return %c0_i32, %c0_i32_0 : i32, i32
  }
  func.func @transform_5(%arg0: i32) -> (i32, i32) {
    %c0_i32 = arith.constant 0 : i32
    %c0_i32_0 = arith.constant 0 : i32
    return %arg0, %c0_i32 : i32, i32
  }
}

</mosaic_0001>

<llo_original>
// kernel: tpu_custom_call.1
$region0: #{tpu_custom_call.1}
  #allocation0 [shape = 'u32[]', space=smem, size = 0x4, offset = 0x4, fixed_abs, tag = 'smem constant byte address 0x4 - core index']
  #allocation1 [shape = 'u32[144,128]{1,0:T(1,128)}', space=vmem, size = 0x12000, scoped, tag = 'internal scratch']
  #allocation2 [shape = 'f32[1,1]{1,0:T(1,128)S(1)}', space=vmem, size = 0x200, scoped, tag = 'scoped memory for tpu_custom_call.1']
  %s0 = inlined_call_operand.vmem [shape: f32[512,8], index: 0, kind: input, shape index: {}]
  %s1 = inlined_call_operand.vmem [shape: bf16[8,128], index: 1, kind: input, shape index: {}]
  %s2 = inlined_call_operand.vmem [shape: f32[1,128], index: 2, kind: input, shape index: {}]
  %s3 = inlined_call_operand.vmem [shape: bf16[128,1], index: 3, kind: input, shape index: {}]
  %s4 = inlined_call_operand.<no memory space> [shape: f32[1,1], index: 4, kind: input, shape index: {}]
  %s5 = inlined_call_operand.vmem [shape: f32[512,1], index: 5, kind: output, shape index: {}]
  %s6 = sld [smem:[#allocation0]]
  $region30: #{tpu_custom_call.1} parent=0
    _
  %s8 = ssub.s32 1, %s6
  %s9 = scalar_select 0, %s8, %s6
  %v10 = vstv %s4
  %11 = vst [vmem:[#allocation2] sm:$0x1] %v10
  // Predicated region
  $region2: #{tpu_custom_call.1} parent=0 // pred_check
    _
  $region3: #{tpu_custom_call.1} parent=0 // pred_check_branch
    %13 = sbr.rel (0) target = $region5
  $region4: #{tpu_custom_call.1} parent=0 // pred_region
    _
  $region5: #{tpu_custom_call.1} parent=0 // pred_fallthru
    _
  // Predicated region
  $region6: #{tpu_custom_call.1} parent=0 // pred_check
    _
  $region7: #{tpu_custom_call.1} parent=0 // pred_check_branch
    %15 = sbr.rel (0) target = $region9
  $region8: #{tpu_custom_call.1} parent=0 // pred_region
    _
  $region9: #{tpu_custom_call.1} parent=0 // pred_fallthru
    _
  // Predicated region
  $region10: #{tpu_custom_call.1} parent=0 // pred_check
    _
  $region11: #{tpu_custom_call.1} parent=0 // pred_check_branch
    %17 = sbr.rel (0) target = $region13
  $region12: #{tpu_custom_call.1} parent=0 // pred_region
    _
  $region13: #{tpu_custom_call.1} parent=0 // pred_fallthru
    _
  // Predicated region
  $region14: #{tpu_custom_call.1} parent=0 // pred_check
    _
  $region15: #{tpu_custom_call.1} parent=0 // pred_check_branch
    %19 = sbr.rel (0) target = $region17
  $region16: #{tpu_custom_call.1} parent=0 // pred_region
    _
  $region17: #{tpu_custom_call.1} parent=0 // pred_fallthru
    _
  // Predicated region
  $region18: #{tpu_custom_call.1} parent=0 // pred_check
    _
  $region19: #{tpu_custom_call.1} parent=0 // pred_check_branch
    %21 = sbr.rel (0) target = $region21
  $region20: #{tpu_custom_call.1} parent=0 // pred_region
    _
  $region21: #{tpu_custom_call.1} parent=0 // pred_fallthru
    _
  %v23 = vld [vmem:[%s1] sm:$0xf]
  %v24 = vld [vmem:[%s2] sm:$0x1]
  %v25 = vld [vmem:[%s3] sm:$0xf]
  %v26 = vld [vmem:[%s3 + $0x4] sm:$0xf]
  %v27 = vld [vmem:[%s3 + $0x8] sm:$0xf]
  %v28 = vld [vmem:[%s3 + $0xc] sm:$0xf]
  %v29 = vld [vmem:[%s3 + $0x10] sm:$0xf]
  %v30 = vld [vmem:[%s3 + $0x14] sm:$0xf]
  %v31 = vld [vmem:[%s3 + $0x18] sm:$0xf]
  %v32 = vld [vmem:[%s3 + $0x1c] sm:$0xf]
  %v33 = vld [vmem:[%s3 + $0x20] sm:$0xf]
  %v34 = vld [vmem:[%s3 + $0x24] sm:$0xf]
  %v35 = vld [vmem:[%s3 + $0x28] sm:$0xf]
  %v36 = vld [vmem:[%s3 + $0x2c] sm:$0xf]
  %v37 = vld [vmem:[%s3 + $0x30] sm:$0xf]
  %v38 = vld [vmem:[%s3 + $0x34] sm:$0xf]
  %v39 = vld [vmem:[%s3 + $0x38] sm:$0xf]
  %v40 = vld [vmem:[%s3 + $0x3c] sm:$0xf]
  %v41 = vld [vmem:[#allocation2] sm:$0x1]
  %v42 = vld [vmem:[%s0] sm:$0xff]
  %v43 = vld [vmem:[%s0 + $0x8] sm:$0xff]
  %v44 = vld [vmem:[%s0 + $0x10] sm:$0xff]
  %v45 = vld [vmem:[%s0 + $0x18] sm:$0xff]
  %v46 = vld [vmem:[%s0 + $0x20] sm:$0xff]
  %v47 = vld [vmem:[%s0 + $0x28] sm:$0xff]
  %v48 = vld [vmem:[%s0 + $0x30] sm:$0xff]
  %v49 = vld [vmem:[%s0 + $0x38] sm:$0xff]
  %v50 = vld [vmem:[%s0 + $0x40] sm:$0xff]
  %v51 = vld [vmem:[%s0 + $0x48] sm:$0xff]
  %v52 = vld [vmem:[%s0 + $0x50] sm:$0xff]
  %v53 = vld [vmem:[%s0 + $0x58] sm:$0xff]
  %v54 = vld [vmem:[%s0 + $0x60] sm:$0xff]
  %v55 = vld [vmem:[%s0 + $0x68] sm:$0xff]
  %v56 = vld [vmem:[%s0 + $0x70] sm:$0xff]
  %v57 = vld [vmem:[%s0 + $0x78] sm:$0xff]
  %v58 = vld [vmem:[%s0 + $0x80] sm:$0xff]
  %v59 = vld [vmem:[%s0 + $0x88] sm:$0xff]
  %v60 = vld [vmem:[%s0 + $0x90] sm:$0xff]
  %v61 = vld [vmem:[%s0 + $0x98] sm:$0xff]
  %v62 = vld [vmem:[%s0 + $0xa0] sm:$0xff]
  %v63 = vld [vmem:[%s0 + $0xa8] sm:$0xff]
  %v64 = vld [vmem:[%s0 + $0xb0] sm:$0xff]
  %v65 = vld [vmem:[%s0 + $0xb8] sm:$0xff]
  %v66 = vld [vmem:[%s0 + $0xc0] sm:$0xff]
  %v67 = vld [vmem:[%s0 + $0xc8] sm:$0xff]
  %v68 = vld [vmem:[%s0 + $0xd0] sm:$0xff]
  %v69 = vld [vmem:[%s0 + $0xd8] sm:$0xff]
  %v70 = vld [vmem:[%s0 + $0xe0] sm:$0xff]
  %v71 = vld [vmem:[%s0 + $0xe8] sm:$0xff]
  %v72 = vld [vmem:[%s0 + $0xf0] sm:$0xff]
  %v73 = vld [vmem:[%s0 + $0xf8] sm:$0xff]
  %v74 = vld [vmem:[%s0 + $0x100] sm:$0xff]
  %v75 = vld [vmem:[%s0 + $0x108] sm:$0xff]
  %v76 = vld [vmem:[%s0 + $0x110] sm:$0xff]
  %v77 = vld [vmem:[%s0 + $0x118] sm:$0xff]
  %v78 = vld [vmem:[%s0 + $0x120] sm:$0xff]
  %v79 = vld [vmem:[%s0 + $0x128] sm:$0xff]
  %v80 = vld [vmem:[%s0 + $0x130] sm:$0xff]
  %v81 = vld [vmem:[%s0 + $0x138] sm:$0xff]
  %v82 = vld [vmem:[%s0 + $0x140] sm:$0xff]
  %v83 = vld [vmem:[%s0 + $0x148] sm:$0xff]
  %v84 = vld [vmem:[%s0 + $0x150] sm:$0xff]
  %v85 = vld [vmem:[%s0 + $0x158] sm:$0xff]
  %v86 = vld [vmem:[%s0 + $0x160] sm:$0xff]
  %v87 = vld [vmem:[%s0 + $0x168] sm:$0xff]
  %v88 = vld [vmem:[%s0 + $0x170] sm:$0xff]
  %v89 = vld [vmem:[%s0 + $0x178] sm:$0xff]
  %v90 = vld [vmem:[%s0 + $0x180] sm:$0xff]
  %v91 = vld [vmem:[%s0 + $0x188] sm:$0xff]
  %v92 = vld [vmem:[%s0 + $0x190] sm:$0xff]
  %v93 = vld [vmem:[%s0 + $0x198] sm:$0xff]
  %v94 = vld [vmem:[%s0 + $0x1a0] sm:$0xff]
  %v95 = vld [vmem:[%s0 + $0x1a8] sm:$0xff]
  %v96 = vld [vmem:[%s0 + $0x1b0] sm:$0xff]
  %v97 = vld [vmem:[%s0 + $0x1b8] sm:$0xff]
  %v98 = vld [vmem:[%s0 + $0x1c0] sm:$0xff]
  %v99 = vld [vmem:[%s0 + $0x1c8] sm:$0xff]
  %v100 = vld [vmem:[%s0 + $0x1d0] sm:$0xff]
  %v101 = vld [vmem:[%s0 + $0x1d8] sm:$0xff]
  %v102 = vld [vmem:[%s0 + $0x1e0] sm:$0xff]
  %v103 = vld [vmem:[%s0 + $0x1e8] sm:$0xff]
  %v104 = vld [vmem:[%s0 + $0x1f0] sm:$0xff]
  %v105 = vld [vmem:[%s0 + $0x1f8] sm:$0xff]
  %v106 = vpack.c.bf16 %v43, %v42
  %v107 = vpack.c.bf16 %v45, %v44
  %v108 = vpack.c.bf16 %v47, %v46
  %v109 = vpack.c.bf16 %v49, %v48
  %v110 = vpack.c.bf16 %v51, %v50
  %v111 = vpack.c.bf16 %v53, %v52
  %v112 = vpack.c.bf16 %v55, %v54
  %v113 = vpack.c.bf16 %v57, %v56
  %v114 = vpack.c.bf16 %v59, %v58
  %v115 = vpack.c.bf16 %v61, %v60
  %v116 = vpack.c.bf16 %v63, %v62
  %v117 = vpack.c.bf16 %v65, %v64
  %v118 = vpack.c.bf16 %v67, %v66
  %v119 = vpack.c.bf16 %v69, %v68
  %v120 = vpack.c.bf16 %v71, %v70
  %v121 = vpack.c.bf16 %v73, %v72
  %v122 = vpack.c.bf16 %v75, %v74
  %v123 = vpack.c.bf16 %v77, %v76
  %v124 = vpack.c.bf16 %v79, %v78
  %v125 = vpack.c.bf16 %v81, %v80
  %v126 = vpack.c.bf16 %v83, %v82
  %v127 = vpack.c.bf16 %v85, %v84
  %v128 = vpack.c.bf16 %v87, %v86
  %v129 = vpack.c.bf16 %v89, %v88
  %v130 = vpack.c.bf16 %v91, %v90
  %v131 = vpack.c.bf16 %v93, %v92
  %v132 = vpack.c.bf16 %v95, %v94
  %v133 = vpack.c.bf16 %v97, %v96
  %v134 = vpack.c.bf16 %v99, %v98
  %v135 = vpack.c.bf16 %v101, %v100
  %v136 = vpack.c.bf16 %v103, %v102
  %v137 = vpack.c.bf16 %v105, %v104
  %v139 = vlaneseq
  %v140 = vshrl.u32 %v139, 7
  %v141 = vsub.s32 0, %v140
  %v142 = vrot.slane %v24, %v141
  %vm144 = vcmask 64512
  %v146 = vsel %vm144, %v106, 0
  %v149 = vsel %vm144, %v107, 0
  %v152 = vsel %vm144, %v108, 0
  %v155 = vsel %vm144, %v109, 0
  %v158 = vsel %vm144, %v110, 0
  %v161 = vsel %vm144, %v111, 0
  %v164 = vsel %vm144, %v112, 0
  %v167 = vsel %vm144, %v113, 0
  %v170 = vsel %vm144, %v114, 0
  %v173 = vsel %vm144, %v115, 0
  %v176 = vsel %vm144, %v116, 0
  %v179 = vsel %vm144, %v117, 0
  %v182 = vsel %vm144, %v118, 0
  %v185 = vsel %vm144, %v119, 0
  %v188 = vsel %vm144, %v120, 0
  %v191 = vsel %vm144, %v121, 0
  %v194 = vsel %vm144, %v122, 0
  %v197 = vsel %vm144, %v123, 0
  %v200 = vsel %vm144, %v124, 0
  %v203 = vsel %vm144, %v125, 0
  %v206 = vsel %vm144, %v126, 0
  %v209 = vsel %vm144, %v127, 0
  %v212 = vsel %vm144, %v128, 0
  %v215 = vsel %vm144, %v129, 0
  %v218 = vsel %vm144, %v130, 0
  %v221 = vsel %vm144, %v131, 0
  %v224 = vsel %vm144, %v132, 0
  %v227 = vsel %vm144, %v133, 0
  %v230 = vsel %vm144, %v134, 0
  %v233 = vsel %vm144, %v135, 0
  %v236 = vsel %vm144, %v136, 0
  %v239 = vsel %vm144, %v137, 0
  %vm241 = vcmask 1043456
  %v243 = vsel %vm241, %v23, 0
  %245 = vmatprep.subr.bf16.mxu0 0
  %246 = vmatpush1.bf16.msra.mxu0 0
  %247 = vmatprep.subr.bf16.mxu0 0
  %248 = vmatpush1.bf16.msra.mxu0 0
  %249 = vmatprep.subr.bf16.mxu0 0
  %250 = vmatpush1.bf16.msra.mxu0 0
  %251 = vmatprep.subr.bf16.mxu0 0
  %252 = vmatpush1.bf16.msra.mxu0 0
  %253 = vmatprep.subr.bf16.mxu0 0
  %254 = vmatpush1.bf16.msra.mxu0 0
  %255 = vmatprep.subr.bf16.mxu0 0
  %256 = vmatpush1.bf16.msra.mxu0 0
  %257 = vmatprep.subr.bf16.mxu0 0
  %258 = vmatpush1.bf16.msra.mxu0 0
  %259 = vmatprep.subr.bf16.mxu0 0
  %260 = vmatpush1.bf16.msra.mxu0 %v243
  %261 = vmatprep.subr.bf16.mxu0 0
  %262 = vmatpush2.bf16.msra.mxu0 0
  %263 = vmatprep.subr.bf16.mxu0 0
  %264 = vmatpush2.bf16.msra.mxu0 0
  %265 = vmatprep.subr.bf16.mxu0 0
  %266 = vmatpush2.bf16.msra.mxu0 0
  %267 = vmatprep.subr.bf16.mxu0 0
  %268 = vmatpush2.bf16.msra.mxu0 0
  %269 = vmatprep.subr.bf16.mxu0 0
  %270 = vmatpush2.bf16.msra.mxu0 0
  %271 = vmatprep.subr.bf16.mxu0 0
  %272 = vmatpush2.bf16.msra.mxu0 0
  %273 = vmatprep.subr.bf16.mxu0 0
  %274 = vmatpush2.bf16.msra.mxu0 0
  %275 = vmatprep.subr.bf16.mxu0 0
  %276 = vmatpush2.bf16.msra.mxu0 0
  %277 = vmatprep.mubr.bf16.mxu0 0
  %278 = vmatmul.mubr.bf16.gmra.mxu0 %v146
  %v279 = vpop.f32.mrf.mxu0
  %v280 = vadd.f32 %v142, %v279
  %v281 = vpop.f32.mrf.mxu0
  %v282 = vpop.f32.mrf.mxu0
  %v283 = vadd.f32 %v142, %v282
  %v284 = vpop.f32.mrf.mxu0
  %285 = vmatprep.mubr.bf16.mxu0 0
  %286 = vmatmul.mubr.bf16.gmra.mxu0 %v149
  %v287 = vpop.f32.mrf.mxu0
  %v288 = vadd.f32 %v142, %v287
  %v289 = vpop.f32.mrf.mxu0
  %v290 = vpop.f32.mrf.mxu0
  %v291 = vadd.f32 %v142, %v290
  %v292 = vpop.f32.mrf.mxu0
  %293 = vmatprep.mubr.bf16.mxu0 0
  %294 = vmatmul.mubr.bf16.gmra.mxu0 %v152
  %v295 = vpop.f32.mrf.mxu0
  %v296 = vadd.f32 %v142, %v295
  %v297 = vpop.f32.mrf.mxu0
  %v298 = vpop.f32.mrf.mxu0
  %v299 = vadd.f32 %v142, %v298
  %v300 = vpop.f32.mrf.mxu0
  %301 = vmatprep.mubr.bf16.mxu0 0
  %302 = vmatmul.mubr.bf16.gmra.mxu0 %v155
  %v303 = vpop.f32.mrf.mxu0
  %v304 = vadd.f32 %v142, %v303
  %v305 = vpop.f32.mrf.mxu0
  %v306 = vpop.f32.mrf.mxu0
  %v307 = vadd.f32 %v142, %v306
  %v308 = vpop.f32.mrf.mxu0
  %309 = vmatprep.mubr.bf16.mxu0 0
  %310 = vmatmul.mubr.bf16.gmra.mxu0 %v158
  %v311 = vpop.f32.mrf.mxu0
  %v312 = vadd.f32 %v142, %v311
  %v313 = vpop.f32.mrf.mxu0
  %v314 = vpop.f32.mrf.mxu0
  %v315 = vadd.f32 %v142, %v314
  %v316 = vpop.f32.mrf.mxu0
  %317 = vmatprep.mubr.bf16.mxu0 0
  %318 = vmatmul.mubr.bf16.gmra.mxu0 %v161
  %v319 = vpop.f32.mrf.mxu0
  %v320 = vadd.f32 %v142, %v319
  %v321 = vpop.f32.mrf.mxu0
  %v322 = vpop.f32.mrf.mxu0
  %v323 = vadd.f32 %v142, %v322
  %v324 = vpop.f32.mrf.mxu0
  %325 = vmatprep.mubr.bf16.mxu0 0
  %326 = vmatmul.mubr.bf16.gmra.mxu0 %v164
  %v327 = vpop.f32.mrf.mxu0
  %v328 = vadd.f32 %v142, %v327
  %v329 = vpop.f32.mrf.mxu0
  %v330 = vpop.f32.mrf.mxu0
  %v331 = vadd.f32 %v142, %v330
  %v332 = vpop.f32.mrf.mxu0
  %333 = vmatprep.mubr.bf16.mxu0 0
  %334 = vmatmul.mubr.bf16.gmra.mxu0 %v167
  %v335 = vpop.f32.mrf.mxu0
  %v336 = vadd.f32 %v142, %v335
  %v337 = vpop.f32.mrf.mxu0
  %v338 = vpop.f32.mrf.mxu0
  %v339 = vadd.f32 %v142, %v338
  %v340 = vpop.f32.mrf.mxu0
  %341 = vmatprep.mubr.bf16.mxu0 0
  %342 = vmatmul.mubr.bf16.gmra.mxu0 %v170
  %v343 = vpop.f32.mrf.mxu0
  %v344 = vadd.f32 %v142, %v343
  %v345 = vpop.f32.mrf.mxu0
  %v346 = vpop.f32.mrf.mxu0
  %v347 = vadd.f32 %v142, %v346
  %v348 = vpop.f32.mrf.mxu0
  %349 = vmatprep.mubr.bf16.mxu0 0
  %350 = vmatmul.mubr.bf16.gmra.mxu0 %v173
  %v351 = vpop.f32.mrf.mxu0
  %v352 = vadd.f32 %v142, %v351
  %v353 = vpop.f32.mrf.mxu0
  %v354 = vpop.f32.mrf.mxu0
  %v355 = vadd.f32 %v142, %v354
  %v356 = vpop.f32.mrf.mxu0
  %357 = vmatprep.mubr.bf16.mxu0 0
  %358 = vmatmul.mubr.bf16.gmra.mxu0 %v176
  %v359 = vpop.f32.mrf.mxu0
  %v360 = vadd.f32 %v142, %v359
  %v361 = vpop.f32.mrf.mxu0
  %v362 = vpop.f32.mrf.mxu0
  %v363 = vadd.f32 %v142, %v362
  %v364 = vpop.f32.mrf.mxu0
  %365 = vmatprep.mubr.bf16.mxu0 0
  %366 = vmatmul.mubr.bf16.gmra.mxu0 %v179
  %v367 = vpop.f32.mrf.mxu0
  %v368 = vadd.f32 %v142, %v367
  %v369 = vpop.f32.mrf.mxu0
  %v370 = vpop.f32.mrf.mxu0
  %v371 = vadd.f32 %v142, %v370
  %v372 = vpop.f32.mrf.mxu0
  %373 = vmatprep.mubr.bf16.mxu0 0
  %374 = vmatmul.mubr.bf16.gmra.mxu0 %v182
  %v375 = vpop.f32.mrf.mxu0
  %v376 = vadd.f32 %v142, %v375
  %v377 = vpop.f32.mrf.mxu0
  %v378 = vpop.f32.mrf.mxu0
  %v379 = vadd.f32 %v142, %v378
  %v380 = vpop.f32.mrf.mxu0
  %381 = vmatprep.mubr.bf16.mxu0 0
  %382 = vmatmul.mubr.bf16.gmra.mxu0 %v185
  %v383 = vpop.f32.mrf.mxu0
  %v384 = vadd.f32 %v142, %v383
  %v385 = vpop.f32.mrf.mxu0
  %v386 = vpop.f32.mrf.mxu0
  %v387 = vadd.f32 %v142, %v386
  %v388 = vpop.f32.mrf.mxu0
  %389 = vmatprep.mubr.bf16.mxu0 0
  %390 = vmatmul.mubr.bf16.gmra.mxu0 %v188
  %v391 = vpop.f32.mrf.mxu0
  %v392 = vadd.f32 %v142, %v391
  %v393 = vpop.f32.mrf.mxu0
  %v394 = vpop.f32.mrf.mxu0
  %v395 = vadd.f32 %v142, %v394
  %v396 = vpop.f32.mrf.mxu0
  %397 = vmatprep.mubr.bf16.mxu0 0
  %398 = vmatmul.mubr.bf16.gmra.mxu0 %v191
  %v399 = vpop.f32.mrf.mxu0
  %v400 = vadd.f32 %v142, %v399
  %v401 = vpop.f32.mrf.mxu0
  %v402 = vpop.f32.mrf.mxu0
  %v403 = vadd.f32 %v142, %v402
  %v404 = vpop.f32.mrf.mxu0
  %405 = vmatprep.mubr.bf16.mxu0 0
  %406 = vmatmul.mubr.bf16.gmra.mxu0 %v194
  %v407 = vpop.f32.mrf.mxu0
  %v408 = vadd.f32 %v142, %v407
  %v409 = vpop.f32.mrf.mxu0
  %v410 = vpop.f32.mrf.mxu0
  %v411 = vadd.f32 %v142, %v410
  %v412 = vpop.f32.mrf.mxu0
  %413 = vmatprep.mubr.bf16.mxu0 0
  %414 = vmatmul.mubr.bf16.gmra.mxu0 %v197
  %v415 = vpop.f32.mrf.mxu0
  %v416 = vadd.f32 %v142, %v415
  %v417 = vpop.f32.mrf.mxu0
  %v418 = vpop.f32.mrf.mxu0
  %v419 = vadd.f32 %v142, %v418
  %v420 = vpop.f32.mrf.mxu0
  %421 = vmatprep.mubr.bf16.mxu0 0
  %422 = vmatmul.mubr.bf16.gmra.mxu0 %v200
  %v423 = vpop.f32.mrf.mxu0
  %v424 = vadd.f32 %v142, %v423
  %v425 = vpop.f32.mrf.mxu0
  %v426 = vpop.f32.mrf.mxu0
  %v427 = vadd.f32 %v142, %v426
  %v428 = vpop.f32.mrf.mxu0
  %429 = vmatprep.mubr.bf16.mxu0 0
  %430 = vmatmul.mubr.bf16.gmra.mxu0 %v203
  %v431 = vpop.f32.mrf.mxu0
  %v432 = vadd.f32 %v142, %v431
  %v433 = vpop.f32.mrf.mxu0
  %v434 = vpop.f32.mrf.mxu0
  %v435 = vadd.f32 %v142, %v434
  %v436 = vpop.f32.mrf.mxu0
  %437 = vmatprep.mubr.bf16.mxu0 0
  %438 = vmatmul.mubr.bf16.gmra.mxu0 %v206
  %v439 = vpop.f32.mrf.mxu0
  %v440 = vadd.f32 %v142, %v439
  %v441 = vpop.f32.mrf.mxu0
  %v442 = vpop.f32.mrf.mxu0
  %v443 = vadd.f32 %v142, %v442
  %v444 = vpop.f32.mrf.mxu0
  %445 = vmatprep.mubr.bf16.mxu0 0
  %446 = vmatmul.mubr.bf16.gmra.mxu0 %v209
  %v447 = vpop.f32.mrf.mxu0
  %v448 = vadd.f32 %v142, %v447
  %v449 = vpop.f32.mrf.mxu0
  %v450 = vpop.f32.mrf.mxu0
  %v451 = vadd.f32 %v142, %v450
  %v452 = vpop.f32.mrf.mxu0
  %453 = vmatprep.mubr.bf16.mxu0 0
  %454 = vmatmul.mubr.bf16.gmra.mxu0 %v212
  %v455 = vpop.f32.mrf.mxu0
  %v456 = vadd.f32 %v142, %v455
  %v457 = vpop.f32.mrf.mxu0
  %v458 = vpop.f32.mrf.mxu0
  %v459 = vadd.f32 %v142, %v458
  %v460 = vpop.f32.mrf.mxu0
  %461 = vmatprep.mubr.bf16.mxu0 0
  %462 = vmatmul.mubr.bf16.gmra.mxu0 %v215
  %v463 = vpop.f32.mrf.mxu0
  %v464 = vadd.f32 %v142, %v463
  %v465 = vpop.f32.mrf.mxu0
  %v466 = vpop.f32.mrf.mxu0
  %v467 = vadd.f32 %v142, %v466
  %v468 = vpop.f32.mrf.mxu0
  %469 = vmatprep.mubr.bf16.mxu0 0
  %470 = vmatmul.mubr.bf16.gmra.mxu0 %v218
  %v471 = vpop.f32.mrf.mxu0
  %v472 = vadd.f32 %v142, %v471
  %v473 = vpop.f32.mrf.mxu0
  %v474 = vpop.f32.mrf.mxu0
  %v475 = vadd.f32 %v142, %v474
  %v476 = vpop.f32.mrf.mxu0
  %477 = vmatprep.mubr.bf16.mxu0 0
  %478 = vmatmul.mubr.bf16.gmra.mxu0 %v221
  %v479 = vpop.f32.mrf.mxu0
  %v480 = vadd.f32 %v142, %v479
  %v481 = vpop.f32.mrf.mxu0
  %v482 = vpop.f32.mrf.mxu0
  %v483 = vadd.f32 %v142, %v482
  %v484 = vpop.f32.mrf.mxu0
  %485 = vmatprep.mubr.bf16.mxu0 0
  %486 = vmatmul.mubr.bf16.gmra.mxu0 %v224
  %v487 = vpop.f32.mrf.mxu0
  %v488 = vadd.f32 %v142, %v487
  %v489 = vpop.f32.mrf.mxu0
  %v490 = vpop.f32.mrf.mxu0
  %v491 = vadd.f32 %v142, %v490
  %v492 = vpop.f32.mrf.mxu0
  %493 = vmatprep.mubr.bf16.mxu0 0
  %494 = vmatmul.mubr.bf16.gmra.mxu0 %v227
  %v495 = vpop.f32.mrf.mxu0
  %v496 = vadd.f32 %v142, %v495
  %v497 = vpop.f32.mrf.mxu0
  %v498 = vpop.f32.mrf.mxu0
  %v499 = vadd.f32 %v142, %v498
  %v500 = vpop.f32.mrf.mxu0
  %501 = vmatprep.mubr.bf16.mxu0 0
  %502 = vmatmul.mubr.bf16.gmra.mxu0 %v230
  %v503 = vpop.f32.mrf.mxu0
  %v504 = vadd.f32 %v142, %v503
  %v505 = vpop.f32.mrf.mxu0
  %v506 = vpop.f32.mrf.mxu0
  %v507 = vadd.f32 %v142, %v506
  %v508 = vpop.f32.mrf.mxu0
  %509 = vmatprep.mubr.bf16.mxu0 0
  %510 = vmatmul.mubr.bf16.gmra.mxu0 %v233
  %v511 = vpop.f32.mrf.mxu0
  %v512 = vadd.f32 %v142, %v511
  %v513 = vpop.f32.mrf.mxu0
  %v514 = vpop.f32.mrf.mxu0
  %v515 = vadd.f32 %v142, %v514
  %v516 = vpop.f32.mrf.mxu0
  %517 = vmatprep.mubr.bf16.mxu0 0
  %518 = vmatmul.mubr.bf16.gmra.mxu0 %v236
  %v519 = vpop.f32.mrf.mxu0
  %v520 = vadd.f32 %v142, %v519
  %v521 = vpop.f32.mrf.mxu0
  %v522 = vpop.f32.mrf.mxu0
  %v523 = vadd.f32 %v142, %v522
  %v524 = vpop.f32.mrf.mxu0
  %525 = vmatprep.mubr.bf16.mxu0 0
  %526 = vmatmul.mubr.bf16.gmra.mxu0 %v239
  %v527 = vpop.f32.mrf.mxu0
  %v528 = vadd.f32 %v142, %v527
  %v529 = vpop.f32.mrf.mxu0
  %v530 = vpop.f32.mrf.mxu0
  %v531 = vadd.f32 %v142, %v530
  %v532 = vpop.f32.mrf.mxu0
  %533 = vdwg.mxu0
  %v534 = vmax.f32 %v280, 0.0
  %v535 = vmax.f32 %v283, 0.0
  %v536 = vmax.f32 %v288, 0.0
  %v537 = vmax.f32 %v291, 0.0
  %v538 = vmax.f32 %v296, 0.0
  %v539 = vmax.f32 %v299, 0.0
  %v540 = vmax.f32 %v304, 0.0
  %v541 = vmax.f32 %v307, 0.0
  %v542 = vmax.f32 %v312, 0.0
  %v543 = vmax.f32 %v315, 0.0
  %v544 = vmax.f32 %v320, 0.0
  %v545 = vmax.f32 %v323, 0.0
  %v546 = vmax.f32 %v328, 0.0
  %v547 = vmax.f32 %v331, 0.0
  %v548 = vmax.f32 %v336, 0.0
  %v549 = vmax.f32 %v339, 0.0
  %v550 = vmax.f32 %v344, 0.0
  %v551 = vmax.f32 %v347, 0.0
  %v552 = vmax.f32 %v352, 0.0
  %v553 = vmax.f32 %v355, 0.0
  %v554 = vmax.f32 %v360, 0.0
  %v555 = vmax.f32 %v363, 0.0
  %v556 = vmax.f32 %v368, 0.0
  %v557 = vmax.f32 %v371, 0.0
  %v558 = vmax.f32 %v376, 0.0
  %v559 = vmax.f32 %v379, 0.0
  %v560 = vmax.f32 %v384, 0.0
  %v561 = vmax.f32 %v387, 0.0
  %v562 = vmax.f32 %v392, 0.0
  %v563 = vmax.f32 %v395, 0.0
  %v564 = vmax.f32 %v400, 0.0
  %v565 = vmax.f32 %v403, 0.0
  %v566 = vmax.f32 %v408, 0.0
  %v567 = vmax.f32 %v411, 0.0
  %v568 = vmax.f32 %v416, 0.0
  %v569 = vmax.f32 %v419, 0.0
  %v570 = vmax.f32 %v424, 0.0
  %v571 = vmax.f32 %v427, 0.0
  %v572 = vmax.f32 %v432, 0.0
  %v573 = vmax.f32 %v435, 0.0
  %v574 = vmax.f32 %v440, 0.0
  %v575 = vmax.f32 %v443, 0.0
  %v576 = vmax.f32 %v448, 0.0
  %v577 = vmax.f32 %v451, 0.0
  %v578 = vmax.f32 %v456, 0.0
  %v579 = vmax.f32 %v459, 0.0
  %v580 = vmax.f32 %v464, 0.0
  %v581 = vmax.f32 %v467, 0.0
  %v582 = vmax.f32 %v472, 0.0
  %v583 = vmax.f32 %v475, 0.0
  %v584 = vmax.f32 %v480, 0.0
  %v585 = vmax.f32 %v483, 0.0
  %v586 = vmax.f32 %v488, 0.0
  %v587 = vmax.f32 %v491, 0.0
  %v588 = vmax.f32 %v496, 0.0
  %v589 = vmax.f32 %v499, 0.0
  %v590 = vmax.f32 %v504, 0.0
  %v591 = vmax.f32 %v507, 0.0
  %v592 = vmax.f32 %v512, 0.0
  %v593 = vmax.f32 %v515, 0.0
  %v594 = vmax.f32 %v520, 0.0
  %v595 = vmax.f32 %v523, 0.0
  %v596 = vmax.f32 %v528, 0.0
  %v597 = vmax.f32 %v531, 0.0
  %v598 = vpack.c.bf16 %v535, %v534
  %v599 = vpack.c.bf16 %v537, %v536
  %v600 = vpack.c.bf16 %v539, %v538
  %v601 = vpack.c.bf16 %v541, %v540
  %v602 = vpack.c.bf16 %v543, %v542
  %v603 = vpack.c.bf16 %v545, %v544
  %v604 = vpack.c.bf16 %v547, %v546
  %v605 = vpack.c.bf16 %v549, %v548
  %v606 = vpack.c.bf16 %v551, %v550
  %v607 = vpack.c.bf16 %v553, %v552
  %v608 = vpack.c.bf16 %v555, %v554
  %v609 = vpack.c.bf16 %v557, %v556
  %v610 = vpack.c.bf16 %v559, %v558
  %v611 = vpack.c.bf16 %v561, %v560
  %v612 = vpack.c.bf16 %v563, %v562
  %v613 = vpack.c.bf16 %v565, %v564
  %v614 = vpack.c.bf16 %v567, %v566
  %v615 = vpack.c.bf16 %v569, %v568
  %v616 = vpack.c.bf16 %v571, %v570
  %v617 = vpack.c.bf16 %v573, %v572
  %v618 = vpack.c.bf16 %v575, %v574
  %v619 = vpack.c.bf16 %v577, %v576
  %v620 = vpack.c.bf16 %v579, %v578
  %v621 = vpack.c.bf16 %v581, %v580
  %v622 = vpack.c.bf16 %v583, %v582
  %v623 = vpack.c.bf16 %v585, %v584
  %v624 = vpack.c.bf16 %v587, %v586
  %v625 = vpack.c.bf16 %v589, %v588
  %v626 = vpack.c.bf16 %v591, %v590
  %v627 = vpack.c.bf16 %v593, %v592
  %v628 = vpack.c.bf16 %v595, %v594
  %v629 = vpack.c.bf16 %v597, %v596
  %v631 = vlaneseq
  %v632 = vshrl.u32 %v631, 7
  %v633 = vsub.s32 0, %v632
  %v634 = vrot.slane %v41, %v633
  %v652 = vunpack.c.l.b16 %v25
  %v653 = vunpack.c.l.b16 %v26
  %v654 = vunpack.c.l.b16 %v27
  %v655 = vunpack.c.l.b16 %v28
  %v656 = vunpack.c.l.b16 %v29
  %v657 = vunpack.c.l.b16 %v30
  %v658 = vunpack.c.l.b16 %v31
  %v659 = vunpack.c.l.b16 %v32
  %v660 = vunpack.c.l.b16 %v33
  %v661 = vunpack.c.l.b16 %v34
  %v662 = vunpack.c.l.b16 %v35
  %v663 = vunpack.c.l.b16 %v36
  %v664 = vunpack.c.l.b16 %v37
  %v665 = vunpack.c.l.b16 %v38
  %v666 = vunpack.c.l.b16 %v39
  %v667 = vunpack.c.l.b16 %v40
  %v668 = vpack.c.b16 %v653, %v652
  %v669 = vpack.c.b16 %v655, %v654
  %v670 = vpack.c.b16 %v657, %v656
  %v671 = vpack.c.b16 %v659, %v658
  %v672 = vpack.c.b16 %v661, %v660
  %v673 = vpack.c.b16 %v663, %v662
  %v674 = vpack.c.b16 %v665, %v664
  %v675 = vpack.c.b16 %v667, %v666
  %684 = vmatprep.subr.bf16.mxu0 0
  %685 = vmatpush1.bf16.msra.mxu0 %v675
  %686 = vmatprep.subr.bf16.mxu0 0
  %687 = vmatpush1.bf16.msra.mxu0 %v674
  %688 = vmatprep.subr.bf16.mxu0 0
  %689 = vmatpush1.bf16.msra.mxu0 %v673
  %690 = vmatprep.subr.bf16.mxu0 0
  %691 = vmatpush1.bf16.msra.mxu0 %v672
  %692 = vmatprep.subr.bf16.mxu0 0
  %693 = vmatpush1.bf16.msra.mxu0 %v671
  %694 = vmatprep.subr.bf16.mxu0 0
  %695 = vmatpush1.bf16.msra.mxu0 %v670
  %696 = vmatprep.subr.bf16.mxu0 0
  %697 = vmatpush1.bf16.msra.mxu0 %v669
  %698 = vmatprep.subr.bf16.mxu0 0
  %699 = vmatpush1.bf16.msra.mxu0 %v668
  %700 = vmatprep.subr.bf16.mxu0 0
  %701 = vmatpush2.bf16.msra.mxu0 0
  %702 = vmatprep.subr.bf16.mxu0 0
  %703 = vmatpush2.bf16.msra.mxu0 0
  %704 = vmatprep.subr.bf16.mxu0 0
  %705 = vmatpush2.bf16.msra.mxu0 0
  %706 = vmatprep.subr.bf16.mxu0 0
  %707 = vmatpush2.bf16.msra.mxu0 0
  %708 = vmatprep.subr.bf16.mxu0 0
  %709 = vmatpush2.bf16.msra.mxu0 0
  %710 = vmatprep.subr.bf16.mxu0 0
  %711 = vmatpush2.bf16.msra.mxu0 0
  %712 = vmatprep.subr.bf16.mxu0 0
  %713 = vmatpush2.bf16.msra.mxu0 0
  %714 = vmatprep.subr.bf16.mxu0 0
  %715 = vmatpush2.bf16.msra.mxu0 0
  %716 = vmatprep.mubr.bf16.mxu0 0
  %717 = vmatmul.mubr.bf16.gmra.mxu0 %v598
  %v718 = vpop.f32.mrf.mxu0
  %v719 = vadd.f32 %v634, %v718
  %v720 = vpop.f32.mrf.mxu0
  %v721 = vpop.f32.mrf.mxu0
  %v722 = vadd.f32 %v634, %v721
  %v723 = vpop.f32.mrf.mxu0
  %724 = vmatprep.mubr.bf16.mxu0 0
  %725 = vmatmul.mubr.bf16.gmra.mxu0 %v599
  %v726 = vpop.f32.mrf.mxu0
  %v727 = vadd.f32 %v634, %v726
  %v728 = vpop.f32.mrf.mxu0
  %v729 = vpop.f32.mrf.mxu0
  %v730 = vadd.f32 %v634, %v729
  %v731 = vpop.f32.mrf.mxu0
  %732 = vmatprep.mubr.bf16.mxu0 0
  %733 = vmatmul.mubr.bf16.gmra.mxu0 %v600
  %v734 = vpop.f32.mrf.mxu0
  %v735 = vadd.f32 %v634, %v734
  %v736 = vpop.f32.mrf.mxu0
  %v737 = vpop.f32.mrf.mxu0
  %v738 = vadd.f32 %v634, %v737
  %v739 = vpop.f32.mrf.mxu0
  %740 = vmatprep.mubr.bf16.mxu0 0
  %741 = vmatmul.mubr.bf16.gmra.mxu0 %v601
  %v742 = vpop.f32.mrf.mxu0
  %v743 = vadd.f32 %v634, %v742
  %v744 = vpop.f32.mrf.mxu0
  %v745 = vpop.f32.mrf.mxu0
  %v746 = vadd.f32 %v634, %v745
  %v747 = vpop.f32.mrf.mxu0
  %748 = vmatprep.mubr.bf16.mxu0 0
  %749 = vmatmul.mubr.bf16.gmra.mxu0 %v602
  %v750 = vpop.f32.mrf.mxu0
  %v751 = vadd.f32 %v634, %v750
  %v752 = vpop.f32.mrf.mxu0
  %v753 = vpop.f32.mrf.mxu0
  %v754 = vadd.f32 %v634, %v753
  %v755 = vpop.f32.mrf.mxu0
  %756 = vmatprep.mubr.bf16.mxu0 0
  %757 = vmatmul.mubr.bf16.gmra.mxu0 %v603
  %v758 = vpop.f32.mrf.mxu0
  %v759 = vadd.f32 %v634, %v758
  %v760 = vpop.f32.mrf.mxu0
  %v761 = vpop.f32.mrf.mxu0
  %v762 = vadd.f32 %v634, %v761
  %v763 = vpop.f32.mrf.mxu0
  %764 = vmatprep.mubr.bf16.mxu0 0
  %765 = vmatmul.mubr.bf16.gmra.mxu0 %v604
  %v766 = vpop.f32.mrf.mxu0
  %v767 = vadd.f32 %v634, %v766
  %v768 = vpop.f32.mrf.mxu0
  %v769 = vpop.f32.mrf.mxu0
  %v770 = vadd.f32 %v634, %v769
  %v771 = vpop.f32.mrf.mxu0
  %772 = vmatprep.mubr.bf16.mxu0 0
  %773 = vmatmul.mubr.bf16.gmra.mxu0 %v605
  %v774 = vpop.f32.mrf.mxu0
  %v775 = vadd.f32 %v634, %v774
  %v776 = vpop.f32.mrf.mxu0
  %v777 = vpop.f32.mrf.mxu0
  %v778 = vadd.f32 %v634, %v777
  %v779 = vpop.f32.mrf.mxu0
  %780 = vmatprep.mubr.bf16.mxu0 0
  %781 = vmatmul.mubr.bf16.gmra.mxu0 %v606
  %v782 = vpop.f32.mrf.mxu0
  %v783 = vadd.f32 %v634, %v782
  %v784 = vpop.f32.mrf.mxu0
  %v785 = vpop.f32.mrf.mxu0
  %v786 = vadd.f32 %v634, %v785
  %v787 = vpop.f32.mrf.mxu0
  %788 = vmatprep.mubr.bf16.mxu0 0
  %789 = vmatmul.mubr.bf16.gmra.mxu0 %v607
  %v790 = vpop.f32.mrf.mxu0
  %v791 = vadd.f32 %v634, %v790
  %v792 = vpop.f32.mrf.mxu0
  %v793 = vpop.f32.mrf.mxu0
  %v794 = vadd.f32 %v634, %v793
  %v795 = vpop.f32.mrf.mxu0
  %796 = vmatprep.mubr.bf16.mxu0 0
  %797 = vmatmul.mubr.bf16.gmra.mxu0 %v608
  %v798 = vpop.f32.mrf.mxu0
  %v799 = vadd.f32 %v634, %v798
  %v800 = vpop.f32.mrf.mxu0
  %v801 = vpop.f32.mrf.mxu0
  %v802 = vadd.f32 %v634, %v801
  %v803 = vpop.f32.mrf.mxu0
  %804 = vmatprep.mubr.bf16.mxu0 0
  %805 = vmatmul.mubr.bf16.gmra.mxu0 %v609
  %v806 = vpop.f32.mrf.mxu0
  %v807 = vadd.f32 %v634, %v806
  %v808 = vpop.f32.mrf.mxu0
  %v809 = vpop.f32.mrf.mxu0
  %v810 = vadd.f32 %v634, %v809
  %v811 = vpop.f32.mrf.mxu0
  %812 = vmatprep.mubr.bf16.mxu0 0
  %813 = vmatmul.mubr.bf16.gmra.mxu0 %v610
  %v814 = vpop.f32.mrf.mxu0
  %v815 = vadd.f32 %v634, %v814
  %v816 = vpop.f32.mrf.mxu0
  %v817 = vpop.f32.mrf.mxu0
  %v818 = vadd.f32 %v634, %v817
  %v819 = vpop.f32.mrf.mxu0
  %820 = vmatprep.mubr.bf16.mxu0 0
  %821 = vmatmul.mubr.bf16.gmra.mxu0 %v611
  %v822 = vpop.f32.mrf.mxu0
  %v823 = vadd.f32 %v634, %v822
  %v824 = vpop.f32.mrf.mxu0
  %v825 = vpop.f32.mrf.mxu0
  %v826 = vadd.f32 %v634, %v825
  %v827 = vpop.f32.mrf.mxu0
  %828 = vmatprep.mubr.bf16.mxu0 0
  %829 = vmatmul.mubr.bf16.gmra.mxu0 %v612
  %v830 = vpop.f32.mrf.mxu0
  %v831 = vadd.f32 %v634, %v830
  %v832 = vpop.f32.mrf.mxu0
  %v833 = vpop.f32.mrf.mxu0
  %v834 = vadd.f32 %v634, %v833
  %v835 = vpop.f32.mrf.mxu0
  %836 = vmatprep.mubr.bf16.mxu0 0
  %837 = vmatmul.mubr.bf16.gmra.mxu0 %v613
  %v838 = vpop.f32.mrf.mxu0
  %v839 = vadd.f32 %v634, %v838
  %v840 = vpop.f32.mrf.mxu0
  %v841 = vpop.f32.mrf.mxu0
  %v842 = vadd.f32 %v634, %v841
  %v843 = vpop.f32.mrf.mxu0
  %844 = vmatprep.mubr.bf16.mxu0 0
  %845 = vmatmul.mubr.bf16.gmra.mxu0 %v614
  %v846 = vpop.f32.mrf.mxu0
  %v847 = vadd.f32 %v634, %v846
  %v848 = vpop.f32.mrf.mxu0
  %v849 = vpop.f32.mrf.mxu0
  %v850 = vadd.f32 %v634, %v849
  %v851 = vpop.f32.mrf.mxu0
  %852 = vmatprep.mubr.bf16.mxu0 0
  %853 = vmatmul.mubr.bf16.gmra.mxu0 %v615
  %v854 = vpop.f32.mrf.mxu0
  %v855 = vadd.f32 %v634, %v854
  %v856 = vpop.f32.mrf.mxu0
  %v857 = vpop.f32.mrf.mxu0
  %v858 = vadd.f32 %v634, %v857
  %v859 = vpop.f32.mrf.mxu0
  %860 = vmatprep.mubr.bf16.mxu0 0
  %861 = vmatmul.mubr.bf16.gmra.mxu0 %v616
  %v862 = vpop.f32.mrf.mxu0
  %v863 = vadd.f32 %v634, %v862
  %v864 = vpop.f32.mrf.mxu0
  %v865 = vpop.f32.mrf.mxu0
  %v866 = vadd.f32 %v634, %v865
  %v867 = vpop.f32.mrf.mxu0
  %868 = vmatprep.mubr.bf16.mxu0 0
  %869 = vmatmul.mubr.bf16.gmra.mxu0 %v617
  %v870 = vpop.f32.mrf.mxu0
  %v871 = vadd.f32 %v634, %v870
  %v872 = vpop.f32.mrf.mxu0
  %v873 = vpop.f32.mrf.mxu0
  %v874 = vadd.f32 %v634, %v873
  %v875 = vpop.f32.mrf.mxu0
  %876 = vmatprep.mubr.bf16.mxu0 0
  %877 = vmatmul.mubr.bf16.gmra.mxu0 %v618
  %v878 = vpop.f32.mrf.mxu0
  %v879 = vadd.f32 %v634, %v878
  %v880 = vpop.f32.mrf.mxu0
  %v881 = vpop.f32.mrf.mxu0
  %v882 = vadd.f32 %v634, %v881
  %v883 = vpop.f32.mrf.mxu0
  %884 = vmatprep.mubr.bf16.mxu0 0
  %885 = vmatmul.mubr.bf16.gmra.mxu0 %v619
  %v886 = vpop.f32.mrf.mxu0
  %v887 = vadd.f32 %v634, %v886
  %v888 = vpop.f32.mrf.mxu0
  %v889 = vpop.f32.mrf.mxu0
  %v890 = vadd.f32 %v634, %v889
  %v891 = vpop.f32.mrf.mxu0
  %892 = vmatprep.mubr.bf16.mxu0 0
  %893 = vmatmul.mubr.bf16.gmra.mxu0 %v620
  %v894 = vpop.f32.mrf.mxu0
  %v895 = vadd.f32 %v634, %v894
  %v896 = vpop.f32.mrf.mxu0
  %v897 = vpop.f32.mrf.mxu0
  %v898 = vadd.f32 %v634, %v897
  %v899 = vpop.f32.mrf.mxu0
  %900 = vmatprep.mubr.bf16.mxu0 0
  %901 = vmatmul.mubr.bf16.gmra.mxu0 %v621
  %v902 = vpop.f32.mrf.mxu0
  %v903 = vadd.f32 %v634, %v902
  %v904 = vpop.f32.mrf.mxu0
  %v905 = vpop.f32.mrf.mxu0
  %v906 = vadd.f32 %v634, %v905
  %v907 = vpop.f32.mrf.mxu0
  %908 = vmatprep.mubr.bf16.mxu0 0
  %909 = vmatmul.mubr.bf16.gmra.mxu0 %v622
  %v910 = vpop.f32.mrf.mxu0
  %v911 = vadd.f32 %v634, %v910
  %v912 = vpop.f32.mrf.mxu0
  %v913 = vpop.f32.mrf.mxu0
  %v914 = vadd.f32 %v634, %v913
  %v915 = vpop.f32.mrf.mxu0
  %916 = vmatprep.mubr.bf16.mxu0 0
  %917 = vmatmul.mubr.bf16.gmra.mxu0 %v623
  %v918 = vpop.f32.mrf.mxu0
  %v919 = vadd.f32 %v634, %v918
  %v920 = vpop.f32.mrf.mxu0
  %v921 = vpop.f32.mrf.mxu0
  %v922 = vadd.f32 %v634, %v921
  %v923 = vpop.f32.mrf.mxu0
  %924 = vmatprep.mubr.bf16.mxu0 0
  %925 = vmatmul.mubr.bf16.gmra.mxu0 %v624
  %v926 = vpop.f32.mrf.mxu0
  %v927 = vadd.f32 %v634, %v926
  %v928 = vpop.f32.mrf.mxu0
  %v929 = vpop.f32.mrf.mxu0
  %v930 = vadd.f32 %v634, %v929
  %v931 = vpop.f32.mrf.mxu0
  %932 = vmatprep.mubr.bf16.mxu0 0
  %933 = vmatmul.mubr.bf16.gmra.mxu0 %v625
  %v934 = vpop.f32.mrf.mxu0
  %v935 = vadd.f32 %v634, %v934
  %v936 = vpop.f32.mrf.mxu0
  %v937 = vpop.f32.mrf.mxu0
  %v938 = vadd.f32 %v634, %v937
  %v939 = vpop.f32.mrf.mxu0
  %940 = vmatprep.mubr.bf16.mxu0 0
  %941 = vmatmul.mubr.bf16.gmra.mxu0 %v626
  %v942 = vpop.f32.mrf.mxu0
  %v943 = vadd.f32 %v634, %v942
  %v944 = vpop.f32.mrf.mxu0
  %v945 = vpop.f32.mrf.mxu0
  %v946 = vadd.f32 %v634, %v945
  %v947 = vpop.f32.mrf.mxu0
  %948 = vmatprep.mubr.bf16.mxu0 0
  %949 = vmatmul.mubr.bf16.gmra.mxu0 %v627
  %v950 = vpop.f32.mrf.mxu0
  %v951 = vadd.f32 %v634, %v950
  %v952 = vpop.f32.mrf.mxu0
  %v953 = vpop.f32.mrf.mxu0
  %v954 = vadd.f32 %v634, %v953
  %v955 = vpop.f32.mrf.mxu0
  %956 = vmatprep.mubr.bf16.mxu0 0
  %957 = vmatmul.mubr.bf16.gmra.mxu0 %v628
  %v958 = vpop.f32.mrf.mxu0
  %v959 = vadd.f32 %v634, %v958
  %v960 = vpop.f32.mrf.mxu0
  %v961 = vpop.f32.mrf.mxu0
  %v962 = vadd.f32 %v634, %v961
  %v963 = vpop.f32.mrf.mxu0
  %964 = vmatprep.mubr.bf16.mxu0 0
  %965 = vmatmul.mubr.bf16.gmra.mxu0 %v629
  %v966 = vpop.f32.mrf.mxu0
  %v967 = vadd.f32 %v634, %v966
  %v968 = vpop.f32.mrf.mxu0
  %v969 = vpop.f32.mrf.mxu0
  %v970 = vadd.f32 %v634, %v969
  %v971 = vpop.f32.mrf.mxu0
  %972 = vdwg.mxu0
  %vm973 = vcmask 7168
  %974 = vst.msk [vmem:[%s5] sm:$0xff] %vm973, %v719
  %975 = vst.msk [vmem:[%s5 + $0x8] sm:$0xff] %vm973, %v722
  %976 = vst.msk [vmem:[%s5 + $0x10] sm:$0xff] %vm973, %v727
  %977 = vst.msk [vmem:[%s5 + $0x18] sm:$0xff] %vm973, %v730
  %978 = vst.msk [vmem:[%s5 + $0x20] sm:$0xff] %vm973, %v735
  %979 = vst.msk [vmem:[%s5 + $0x28] sm:$0xff] %vm973, %v738
  %980 = vst.msk [vmem:[%s5 + $0x30] sm:$0xff] %vm973, %v743
  %981 = vst.msk [vmem:[%s5 + $0x38] sm:$0xff] %vm973, %v746
  %982 = vst.msk [vmem:[%s5 + $0x40] sm:$0xff] %vm973, %v751
  %983 = vst.msk [vmem:[%s5 + $0x48] sm:$0xff] %vm973, %v754
  %984 = vst.msk [vmem:[%s5 + $0x50] sm:$0xff] %vm973, %v759
  %985 = vst.msk [vmem:[%s5 + $0x58] sm:$0xff] %vm973, %v762
  %986 = vst.msk [vmem:[%s5 + $0x60] sm:$0xff] %vm973, %v767
  %987 = vst.msk [vmem:[%s5 + $0x68] sm:$0xff] %vm973, %v770
  %988 = vst.msk [vmem:[%s5 + $0x70] sm:$0xff] %vm973, %v775
  %989 = vst.msk [vmem:[%s5 + $0x78] sm:$0xff] %vm973, %v778
  %990 = vst.msk [vmem:[%s5 + $0x80] sm:$0xff] %vm973, %v783
  %991 = vst.msk [vmem:[%s5 + $0x88] sm:$0xff] %vm973, %v786
  %992 = vst.msk [vmem:[%s5 + $0x90] sm:$0xff] %vm973, %v791
  %993 = vst.msk [vmem:[%s5 + $0x98] sm:$0xff] %vm973, %v794
  %994 = vst.msk [vmem:[%s5 + $0xa0] sm:$0xff] %vm973, %v799
  %995 = vst.msk [vmem:[%s5 + $0xa8] sm:$0xff] %vm973, %v802
  %996 = vst.msk [vmem:[%s5 + $0xb0] sm:$0xff] %vm973, %v807
  %997 = vst.msk [vmem:[%s5 + $0xb8] sm:$0xff] %vm973, %v810
  %998 = vst.msk [vmem:[%s5 + $0xc0] sm:$0xff] %vm973, %v815
  %999 = vst.msk [vmem:[%s5 + $0xc8] sm:$0xff] %vm973, %v818
  %1000 = vst.msk [vmem:[%s5 + $0xd0] sm:$0xff] %vm973, %v823
  %1001 = vst.msk [vmem:[%s5 + $0xd8] sm:$0xff] %vm973, %v826
  %1002 = vst.msk [vmem:[%s5 + $0xe0] sm:$0xff] %vm973, %v831
  %1003 = vst.msk [vmem:[%s5 + $0xe8] sm:$0xff] %vm973, %v834
  %1004 = vst.msk [vmem:[%s5 + $0xf0] sm:$0xff] %vm973, %v839
  %1005 = vst.msk [vmem:[%s5 + $0xf8] sm:$0xff] %vm973, %v842
  %1006 = vst.msk [vmem:[%s5 + $0x100] sm:$0xff] %vm973, %v847
  %1007 = vst.msk [vmem:[%s5 + $0x108] sm:$0xff] %vm973, %v850
  %1008 = vst.msk [vmem:[%s5 + $0x110] sm:$0xff] %vm973, %v855
  %1009 = vst.msk [vmem:[%s5 + $0x118] sm:$0xff] %vm973, %v858
  %1010 = vst.msk [vmem:[%s5 + $0x120] sm:$0xff] %vm973, %v863
  %1011 = vst.msk [vmem:[%s5 + $0x128] sm:$0xff] %vm973, %v866
  %1012 = vst.msk [vmem:[%s5 + $0x130] sm:$0xff] %vm973, %v871
  %1013 = vst.msk [vmem:[%s5 + $0x138] sm:$0xff] %vm973, %v874
  %1014 = vst.msk [vmem:[%s5 + $0x140] sm:$0xff] %vm973, %v879
  %1015 = vst.msk [vmem:[%s5 + $0x148] sm:$0xff] %vm973, %v882
  %1016 = vst.msk [vmem:[%s5 + $0x150] sm:$0xff] %vm973, %v887
  %1017 = vst.msk [vmem:[%s5 + $0x158] sm:$0xff] %vm973, %v890
  %1018 = vst.msk [vmem:[%s5 + $0x160] sm:$0xff] %vm973, %v895
  %1019 = vst.msk [vmem:[%s5 + $0x168] sm:$0xff] %vm973, %v898
  %1020 = vst.msk [vmem:[%s5 + $0x170] sm:$0xff] %vm973, %v903
  %1021 = vst.msk [vmem:[%s5 + $0x178] sm:$0xff] %vm973, %v906
  %1022 = vst.msk [vmem:[%s5 + $0x180] sm:$0xff] %vm973, %v911
  %1023 = vst.msk [vmem:[%s5 + $0x188] sm:$0xff] %vm973, %v914
  %1024 = vst.msk [vmem:[%s5 + $0x190] sm:$0xff] %vm973, %v919
  %1025 = vst.msk [vmem:[%s5 + $0x198] sm:$0xff] %vm973, %v922
  %1026 = vst.msk [vmem:[%s5 + $0x1a0] sm:$0xff] %vm973, %v927
  %1027 = vst.msk [vmem:[%s5 + $0x1a8] sm:$0xff] %vm973, %v930
  %1028 = vst.msk [vmem:[%s5 + $0x1b0] sm:$0xff] %vm973, %v935
  %1029 = vst.msk [vmem:[%s5 + $0x1b8] sm:$0xff] %vm973, %v938
  %1030 = vst.msk [vmem:[%s5 + $0x1c0] sm:$0xff] %vm973, %v943
  %1031 = vst.msk [vmem:[%s5 + $0x1c8] sm:$0xff] %vm973, %v946
  %1032 = vst.msk [vmem:[%s5 + $0x1d0] sm:$0xff] %vm973, %v951
  %1033 = vst.msk [vmem:[%s5 + $0x1d8] sm:$0xff] %vm973, %v954
  %1034 = vst.msk [vmem:[%s5 + $0x1e0] sm:$0xff] %vm973, %v959
  %1035 = vst.msk [vmem:[%s5 + $0x1e8] sm:$0xff] %vm973, %v962
  %1036 = vst.msk [vmem:[%s5 + $0x1f0] sm:$0xff] %vm973, %v967
  %1037 = vst.msk [vmem:[%s5 + $0x1f8] sm:$0xff] %vm973, %v970
  // Predicated region
  $region22: #{tpu_custom_call.1} parent=0 // pred_check
    _
  $region23: #{tpu_custom_call.1} parent=0 // pred_check_branch
    %1039 = sbr.rel (0) target = $region25
  $region24: #{tpu_custom_call.1} parent=0 // pred_region
    _
  $region25: #{tpu_custom_call.1} parent=0 // pred_fallthru
    _
  // Predicated region
  $region26: #{tpu_custom_call.1} parent=0 // pred_check
    _
  $region27: #{tpu_custom_call.1} parent=0 // pred_check_branch
    %1041 = sbr.rel (0) target = $region29
  $region28: #{tpu_custom_call.1} parent=0 // pred_region
    _
  $region29: #{tpu_custom_call.1} parent=0 // pred_fallthru
    _

</llo_original>
